<compile_context>
chip_gen: v6e
topology: v6e:2x2x1
jax: 0.10.0
libtpu: 0.0.40
codegen_flags: <defaults>
</compile_context>

<pallas_src>
import jax
import jax.numpy as jnp
from jax.experimental import pallas as pl
from jax.experimental.pallas import tpu as pltpu


def embedding_head_kernel(x_ref, w1_ref, b1_ref, w2_ref, b2_ref, o_ref):
    # x_ref : (C_in,  HW_t)   activation tile (leading batch dim squeezed away)
    # w1_ref: (C_in,  C_in)   conv1 weight with BatchNorm folded in
    # b1_ref: (C_in,  1)      conv1 bias with BatchNorm folded in
    # w2_ref: (C_emb, C_in)   conv2 weight
    # b2_ref: (C_emb, 1)      conv2 bias
    # o_ref : (C_emb, HW_t)
    x = x_ref[...].astype(jnp.float32)

    # conv1 (1x1) + folded BN + ReLU  -- (C_in, C_in) @ (C_in, HW_t)
    h = jnp.dot(w1_ref[...], x, preferred_element_type=jnp.float32)
    h = jnp.maximum(h + b1_ref[...], 0.0)

    # conv2 (1x1)  -- (C_emb, C_in) @ (C_in, HW_t)
    z = jnp.dot(w2_ref[...], h, preferred_element_type=jnp.float32) + b2_ref[...]

    # F.normalize(z, p=2, dim=channel): per-pixel L2 norm over the channel axis.
    ssq = jnp.sum(z * z, axis=0, keepdims=True)          # (1, HW_t)
    inv = jax.lax.rsqrt(jnp.maximum(ssq, 1e-24))         # clamp ~ F.normalize eps=1e-12
    o_ref[...] = (z * inv).astype(o_ref.dtype)


def _pick_hw_tile(hw, batch, max_c, bytes_cap=2 << 20, min_steps=8):
    """Largest lane tile (multiple of 128 dividing HW) that fits the per-buffer
    VMEM byte cap and still leaves enough grid steps for pipelining / megacore."""
    if hw % 128 != 0:
        # TODO(synk): small/ragged spatial sizes stay un-tiled (lane dim < 128
        # falls back to masked stores); pad HW to a multiple of 128 upstream if
        # such shapes show up in deployment.
        return hw
    divisors = [t for t in range(128, hw + 1, 128) if hw % t == 0]
    cap = max(128, (bytes_cap // (4 * max_c)) // 128 * 128)
    fitting = [t for t in divisors if t <= cap] or [divisors[0]]
    good = [t for t in fitting if batch * (hw // t) >= min_steps]
    # Prefer the biggest tile that still yields >= min_steps grid steps; if the
    # whole problem is tiny, just take the biggest tile that fits the cap.
    return max(good) if good else max(fitting)


def embedding_head_forward(x, w1, b1, bn_gamma, bn_beta, bn_mean, bn_var,
                           w2, b2, bn_eps=1e-5):
    """EmbeddingHead('convmlp'): 1x1 conv -> BN(eval) -> ReLU -> 1x1 conv -> L2 norm (dim=1).

    x: (B, C_in, H, W).  w1: (C_in, C_in), b1: (C_in,).  bn_*: (C_in,).
    w2: (C_emb, C_in), b2: (C_emb,).  PyTorch (out, in) weight layout.
    """
    b, c_in, h, w = x.shape
    c_out = w2.shape[0]
    hw = h * w

    # Fold eval-mode BatchNorm into conv1 (a 1x1 conv is a per-pixel matmul).
    # TODO(synk): training-mode BatchNorm (batch statistics) would need an extra
    # batch-wide reduction pass; inference semantics (running stats) implemented.
    scale = bn_gamma / jnp.sqrt(bn_var + bn_eps)
    w1f = (w1 * scale[:, None]).astype(jnp.float32)
    b1f = ((b1 - bn_mean) * scale + bn_beta).reshape(c_in, 1).astype(jnp.float32)
    w2f = w2.astype(jnp.float32)
    b2f = b2.reshape(c_out, 1).astype(jnp.float32)

    x_flat = x.reshape(b, c_in, hw)
    hw_t = _pick_hw_tile(hw, b, max(c_in, c_out))
    grid = (b, pl.cdiv(hw, hw_t))

    out_flat = pl.pallas_call(
        embedding_head_kernel,
        out_shape=jax.ShapeDtypeStruct((b, c_out, hw), x.dtype),
        grid_spec=pltpu.PrefetchScalarGridSpec(
            num_scalar_prefetch=0,
            grid=grid,
            in_specs=[
                # activations: one (C_in, HW_t) slab per (batch, spatial-tile) step
                pl.BlockSpec((pl.Squeezed(), c_in, hw_t), lambda bb, ss: (bb, 0, ss)),
                # weights / biases: resident in VMEM across the whole grid
                pl.BlockSpec((c_in, c_in), lambda bb, ss: (0, 0)),
                pl.BlockSpec((c_in, 1), lambda bb, ss: (0, 0)),
                pl.BlockSpec((c_out, c_in), lambda bb, ss: (0, 0)),
                pl.BlockSpec((c_out, 1), lambda bb, ss: (0, 0)),
            ],
            out_specs=pl.BlockSpec((pl.Squeezed(), c_out, hw_t),
                                   lambda bb, ss: (bb, 0, ss)),
        ),
        compiler_params=pltpu.CompilerParams(
            # both grid axes are fully independent -> megacore sharding on v7x
            dimension_semantics=("parallel", "parallel"),
            # explicit VMEM budget; safe on v5e (16 MiB default) and v7x (64 MiB phys)
            vmem_limit_bytes=32 * 1024 * 1024,
        ),
    )(x_flat, w1f, b1f, w2f, b2f)

    return out_flat.reshape(b, c_out, h, w)


def embedding_head_reference(x, w1, b1, bn_gamma, bn_beta, bn_mean, bn_var,
                             w2, b2, bn_eps=1e-5):
    """Pure-JAX reference (eval-mode BN), full-precision matmuls."""
    hp = jax.lax.Precision.HIGHEST
    b, c, hh, ww = x.shape
    xf = x.reshape(b, c, hh * ww).astype(jnp.float32)
    y = jnp.einsum("oc,bcn->bon", w1, xf, precision=hp) + b1[None, :, None]
    y = (y - bn_mean[None, :, None]) * (bn_gamma / jnp.sqrt(bn_var + bn_eps))[None, :, None] \
        + bn_beta[None, :, None]
    y = jnp.maximum(y, 0.0)
    z = jnp.einsum("oc,bcn->bon", w2, y, precision=hp) + b2[None, :, None]
    norm = jnp.sqrt(jnp.sum(z * z, axis=1, keepdims=True))
    z = z / jnp.maximum(norm, 1e-12)
    return z.reshape(b, -1, hh, ww).astype(x.dtype)


if __name__ == "__main__":
    # Small shapes consistent with the module (dim_in=embed_dim, 1x1 convs),
    # with HW = 16*16 = 256 so the lane dim is a multiple of 128.
    B, C_IN, C_EMB, H, W = 2, 32, 32, 16, 16

    key = jax.random.PRNGKey(0)
    kx, k1, kb1, kg, kb, km, kv, k2, kb2 = jax.random.split(key, 9)

    x = jax.random.normal(kx, (B, C_IN, H, W), dtype=jnp.float32)
    # conv1 / conv2 in PyTorch (out, in) layout, bias=True as in nn.Conv2d default.
    w1 = jax.random.normal(k1, (C_IN, C_IN), dtype=jnp.float32) * 0.1
    b1 = jax.random.normal(kb1, (C_IN,), dtype=jnp.float32) * 0.1
    # BatchNorm2d params + running stats (inference mode).
    bn_gamma = 1.0 + 0.1 * jax.random.normal(kg, (C_IN,), dtype=jnp.float32)
    bn_beta = 0.1 * jax.random.normal(kb, (C_IN,), dtype=jnp.float32)
    bn_mean = 0.1 * jax.random.normal(km, (C_IN,), dtype=jnp.float32)
    bn_var = 0.5 + 0.5 * jnp.abs(jax.random.normal(kv, (C_IN,), dtype=jnp.float32))
    w2 = jax.random.normal(k2, (C_EMB, C_IN), dtype=jnp.float32) * 0.1
    b2 = jax.random.normal(kb2, (C_EMB,), dtype=jnp.float32) * 0.1

    out = embedding_head_forward(x, w1, b1, bn_gamma, bn_beta, bn_mean, bn_var, w2, b2)
    out = jax.block_until_ready(out)

    ref = embedding_head_reference(x, w1, b1, bn_gamma, bn_beta, bn_mean, bn_var, w2, b2)
    assert out.shape == (B, C_EMB, H, W)
    assert jnp.allclose(out, ref, atol=1e-4, rtol=1e-4), "mismatch vs JAX reference"
    # sanity: per-pixel channel L2 norms are 1 (F.normalize semantics)
    norms = jnp.sqrt(jnp.sum(out.astype(jnp.float32) ** 2, axis=1))
    assert jnp.allclose(norms, 1.0, atol=1e-3), "output not unit-normalized over channels"

    print("KERNEL_OK")
</pallas_src>

<mosaic_0001>
module attributes {stable_mosaic.version = 11 : i64} {
  func.func @embedding_head_kernel(%arg0: i32, %arg1: i32, %arg2: memref<1x32x256xf32, #tpu.memory_space<vmem>>, %arg3: memref<32x32xf32, #tpu.memory_space<vmem>>, %arg4: memref<32x1xf32, #tpu.memory_space<vmem>>, %arg5: memref<32x32xf32, #tpu.memory_space<vmem>>, %arg6: memref<32x1xf32, #tpu.memory_space<vmem>>, %arg7: memref<1x32x256xf32, #tpu.memory_space<vmem>>) attributes {dimension_semantics = [#tpu.dimension_semantics<parallel>, #tpu.dimension_semantics<parallel>], iteration_bounds = array<i64: 2, 1>, scalar_prefetch = 0 : i64, scratch_operands = 0 : i64, tpu.core_type = #tpu.core_type<tc>, window_params = [{transform_indices = @transform_0, window_bounds = array<i64: 1, 32, 256>}, {pipeline_mode = #tpu.pipeline_mode<synchronous>, transform_indices = @transform_1, window_bounds = array<i64: 32, 32>}, {pipeline_mode = #tpu.pipeline_mode<synchronous>, transform_indices = @transform_2, window_bounds = array<i64: 32, 1>}, {pipeline_mode = #tpu.pipeline_mode<synchronous>, transform_indices = @transform_3, window_bounds = array<i64: 32, 32>}, {pipeline_mode = #tpu.pipeline_mode<synchronous>, transform_indices = @transform_4, window_bounds = array<i64: 32, 1>}, {transform_indices = @transform_5, window_bounds = array<i64: 1, 32, 256>}]} {
    %c0 = arith.constant 0 : index
    %c0_0 = arith.constant 0 : index
    %c0_1 = arith.constant 0 : index
    %0 = vector.load %arg2[%c0, %c0_0, %c0_1] : memref<1x32x256xf32, #tpu.memory_space<vmem>>, vector<1x32x256xf32>
    %1 = vector.shape_cast %0 : vector<1x32x256xf32> to vector<32x256xf32>
    %c0_2 = arith.constant 0 : index
    %c0_3 = arith.constant 0 : index
    %2 = vector.load %arg3[%c0_2, %c0_3] : memref<32x32xf32, #tpu.memory_space<vmem>>, vector<32x32xf32>
    %cst = arith.constant dense<0.000000e+00> : vector<32x256xf32>
    %3 = tpu.matmul %2, %1, %cst {dimension_numbers = #tpu.dot_dimension_numbers<[1], [0], [0], [1], [0, 0, 1, 1], [], []>} : vector<32x32xf32>, vector<32x256xf32>, vector<32x256xf32> -> vector<32x256xf32>
    %c0_4 = arith.constant 0 : index
    %c0_5 = arith.constant 0 : index
    %4 = vector.load %arg4[%c0_4, %c0_5] : memref<32x1xf32, #tpu.memory_space<vmem>>, vector<32x1xf32>
    %5 = vector.broadcast %4 : vector<32x1xf32> to vector<32x256xf32>
    %6 = arith.addf %3, %5 : vector<32x256xf32>
    %cst_6 = arith.constant 0.000000e+00 : f32
    %7 = vector.broadcast %cst_6 : f32 to vector<32x256xf32>
    %8 = arith.maximumf %6, %7 : vector<32x256xf32>
    %c0_7 = arith.constant 0 : index
    %c0_8 = arith.constant 0 : index
    %9 = vector.load %arg5[%c0_7, %c0_8] : memref<32x32xf32, #tpu.memory_space<vmem>>, vector<32x32xf32>
    %cst_9 = arith.constant dense<0.000000e+00> : vector<32x256xf32>
    %10 = tpu.matmul %9, %8, %cst_9 {dimension_numbers = #tpu.dot_dimension_numbers<[1], [0], [0], [1], [0, 0, 1, 1], [], []>} : vector<32x32xf32>, vector<32x256xf32>, vector<32x256xf32> -> vector<32x256xf32>
    %c0_10 = arith.constant 0 : index
    %c0_11 = arith.constant 0 : index
    %11 = vector.load %arg6[%c0_10, %c0_11] : memref<32x1xf32, #tpu.memory_space<vmem>>, vector<32x1xf32>
    %12 = vector.broadcast %11 : vector<32x1xf32> to vector<32x256xf32>
    %13 = arith.addf %10, %12 : vector<32x256xf32>
    %14 = arith.mulf %13, %13 : vector<32x256xf32>
    %cst_12 = arith.constant dense<0.000000e+00> : vector<256xf32>
    %15 = vector.multi_reduction <add>, %14, %cst_12 [0] : vector<32x256xf32> to vector<256xf32>
    %16 = vector.shape_cast %15 : vector<256xf32> to vector<1x256xf32>
    %cst_13 = arith.constant 1.000000e-24 : f32
    %17 = vector.broadcast %cst_13 : f32 to vector<1x256xf32>
    %18 = arith.maximumf %16, %17 : vector<1x256xf32>
    %19 = math.rsqrt %18 : vector<1x256xf32>
    %20 = vector.broadcast %19 : vector<1x256xf32> to vector<32x256xf32>
    %21 = arith.mulf %13, %20 : vector<32x256xf32>
    %c0_14 = arith.constant 0 : index
    %c0_15 = arith.constant 0 : index
    %c0_16 = arith.constant 0 : index
    %22 = vector.load %arg7[%c0_14, %c0_15, %c0_16] : memref<1x32x256xf32, #tpu.memory_space<vmem>>, vector<1x32x256xf32>
    %23 = vector.shape_cast %22 : vector<1x32x256xf32> to vector<32x256xf32>
    %24 = vector.shape_cast %21 : vector<32x256xf32> to vector<1x32x256xf32>
    tpu.vector_store %arg7[%c0_14, %c0_15, %c0_16], %24 {strides = array<i32>} : memref<1x32x256xf32, #tpu.memory_space<vmem>>, vector<1x32x256xf32>,
    return
  }
  func.func @transform_0(%arg0: i32, %arg1: i32) -> (i32, i32, i32) {
    %c0_i32 = arith.constant 0 : i32
    %c0_i32_0 = arith.constant 0 : i32
    return %arg0, %c0_i32, %arg1 : i32, i32, i32
  }
  func.func @transform_1(%arg0: i32, %arg1: i32) -> (i32, i32) {
    %c0_i32 = arith.constant 0 : i32
    %c0_i32_0 = arith.constant 0 : i32
    %c0_i32_1 = arith.constant 0 : i32
    return %c0_i32, %c0_i32_0 : i32, i32
  }
  func.func @transform_2(%arg0: i32, %arg1: i32) -> (i32, i32) {
    %c0_i32 = arith.constant 0 : i32
    %c0_i32_0 = arith.constant 0 : i32
    %c0_i32_1 = arith.constant 0 : i32
    return %c0_i32, %c0_i32_0 : i32, i32
  }
  func.func @transform_3(%arg0: i32, %arg1: i32) -> (i32, i32) {
    %c0_i32 = arith.constant 0 : i32
    %c0_i32_0 = arith.constant 0 : i32
    %c0_i32_1 = arith.constant 0 : i32
    return %c0_i32, %c0_i32_0 : i32, i32
  }
  func.func @transform_4(%arg0: i32, %arg1: i32) -> (i32, i32) {
    %c0_i32 = arith.constant 0 : i32
    %c0_i32_0 = arith.constant 0 : i32
    %c0_i32_1 = arith.constant 0 : i32
    return %c0_i32, %c0_i32_0 : i32, i32
  }
  func.func @transform_5(%arg0: i32, %arg1: i32) -> (i32, i32, i32) {
    %c0_i32 = arith.constant 0 : i32
    %c0_i32_0 = arith.constant 0 : i32
    return %arg0, %c0_i32, %arg1 : i32, i32, i32
  }
}

</mosaic_0001>

<llo_original>
// kernel: tpu_custom_call.1
$region0: #{tpu_custom_call.1}
  #allocation0 [shape = 'u32[]', space=smem, size = 0x4, offset = 0x4, fixed_abs, tag = 'smem constant byte address 0x4 - core index']
  #allocation1 [shape = 'u32[144,128]{1,0:T(1,128)}', space=vmem, size = 0x12000, scoped, tag = 'internal scratch']
  %s0 = inlined_call_operand.hbm [shape: f32[2,32,256], index: 0, kind: input, shape index: {}]
  %s1 = inlined_call_operand.vmem [shape: f32[32,32], index: 1, kind: input, shape index: {}]
  %s2 = inlined_call_operand.vmem [shape: f32[32,1], index: 2, kind: input, shape index: {}]
  %s3 = inlined_call_operand.vmem [shape: f32[32,32], index: 3, kind: input, shape index: {}]
  %s4 = inlined_call_operand.vmem [shape: f32[32,1], index: 4, kind: input, shape index: {}]
  %s5 = inlined_call_operand.hbm [shape: f32[2,32,256], index: 5, kind: output, shape index: {}]
  %s6 = sld [smem:[#allocation0]]
  $region57: #{tpu_custom_call.1} parent=0
    _
  %s8 = ssub.s32 1, %s6
  %s9 = scalar_select 0, %s8, %s6
  $region1: #{tpu_custom_call.1} parent=0
    #allocation2 [shape = 'u8[65536]{0}', space=vmem, size = 0x10000, scoped, tag = 'input window, operand 0']
    #allocation3 [shape = 's32[2]{0}', space=sflag, size = 0x8, scoped, tag = 'scoped memory for tpu_custom_call.1']
    #allocation4 [shape = 's32[2]{0}', space=sflag, size = 0x8, scoped, tag = 'scoped memory for tpu_custom_call.1']
    #allocation5 [shape = 'u8[65536]{0}', space=vmem, size = 0x10000, scoped, tag = 'output window, operand 0']
    %10 = vsyncpa [#allocation3], 0
    %s11 = scalar_lea.sflag [#allocation3], 1
    %12 = vsyncpa %s11, 0
    %13 = vsyncpa [#allocation4], 0
    %s14 = scalar_lea.sflag [#allocation4], 1
    %15 = vsyncpa %s14, 0
    loop: start=0, step=1, limit=4
    $region2: #{tpu_custom_call.1} parent=1 // loop_pre_header
      _
    $region3: #{tpu_custom_call.1} parent=1 // loop_header
      %s17 = sphi 0, %s21
      %p18 = scmp.ge.s32.totalorder %s17, 4
      %s24 = sphi 0, %s36
      %s25 = sphi 0, %s32
      %s26 = sphi 0, %s24
      %s27 = sphi 0, %s25
      %s28 = sphi 0, %s26
      %s29 = sphi 0, %s27
      %s41 = sphi 0, %s43
      %s44 = sphi 0, %s41
      %s45 = sphi 0, %s44
      %s61 = sphi 0, %s45
      %s65 = sphi 0, %s65
      %s67 = sphi 0, %s65
      %s68 = sphi 0, %s67
      %s82 = sphi 0, %s68
      %s86 = sphi 0, %s86
      %s88 = sphi 0, %s86
      %s89 = sphi 0, %s88
      %s103 = sphi 0, %s89
      %s107 = sphi 0, %s107
      %s109 = sphi 0, %s107
      %s110 = sphi 0, %s109
      %s124 = sphi 0, %s110
      %s128 = sphi 0, %s128
      %s130 = sphi 0, %s128
      %s131 = sphi 0, %s130
      %s145 = sphi 0, %s131
      %s153 = sphi 0, %s155
      %s156 = sphi 0, %s153
      %s157 = sphi 0, %s156
      %s173 = sphi 0, %s157
    $region4: #{tpu_custom_call.1} parent=1 // loop_header_branch
      %20 = sbr.rel (%p18) target = $region8
    $region5: #{tpu_custom_call.1} parent=1 // loop_body
      %s22 = ssub.s32 %s17, 1
      %s23 = ssub.s32 %s17, 2
      %s30 = sadd.s32 1, %s25
      %p31 = scmp.ge.s32.totalorder %s30, 1
      %s32 = scalar_select %p31, 0, %s30
      %s33 = sadd.s32 1, %s24
      %s34 = scalar_select %p31, %s33, %s24
      %p35 = scmp.ge.s32.totalorder %s34, 2
      %s36 = scalar_select %p35, 0, %s34
      %s37 = ssub.s32 %s24, %s36
      %s38 = ssub.s32 %s25, %s32
      %s39 = sor.u32 %s37, %s38
      %p40 = scmp.eq.s32.totalorder %s39, 0
      %s42 = sadd.s32 %s41, 1
      %s43 = scalar_select %p40, %s41, %s42
      %p46 = pneg %p40
      %p47 = scmp.eq.s32.totalorder %s17, 1
      %p48 = por %p46, %p47
      %p49 = scmp.ne.s32.totalorder %s41, %s44
      %p50 = scmp.eq.s32.totalorder %s17, 0
      %p51 = por %p49, %p50
      %p52 = scmp.ne.s32.totalorder %s41, %s44
      %p53 = scmp.eq.s32.totalorder %s22, 1
      %p54 = por %p52, %p53
      %p55 = scmp.ne.s32.totalorder %s44, %s45
      %p56 = scmp.eq.s32.totalorder %s22, 0
      %p57 = por %p55, %p56
      %p58 = scmp.ne.s32.totalorder %s44, %s45
      %p59 = scmp.eq.s32.totalorder %s23, 1
      %p60 = por %p58, %p59
      %p62 = scmp.ne.s32.totalorder %s45, %s61
      %p63 = scmp.eq.s32.totalorder %s23, 0
      %p64 = por %p62, %p63
      %s66 = sadd.s32 %s65, 1
      %p69 = scmp.eq.s32.totalorder %s17, 1
      %p70 = scmp.ne.s32.totalorder %s65, %s67
      %p71 = scmp.eq.s32.totalorder %s17, 0
      %p72 = por %p70, %p71
      %p73 = scmp.ne.s32.totalorder %s65, %s67
      %p74 = scmp.eq.s32.totalorder %s22, 1
      %p75 = por %p73, %p74
      %p76 = scmp.ne.s32.totalorder %s67, %s68
      %p77 = scmp.eq.s32.totalorder %s22, 0
      %p78 = por %p76, %p77
      %p79 = scmp.ne.s32.totalorder %s67, %s68
      %p80 = scmp.eq.s32.totalorder %s23, 1
      %p81 = por %p79, %p80
      %p83 = scmp.ne.s32.totalorder %s68, %s82
      %p84 = scmp.eq.s32.totalorder %s23, 0
      %p85 = por %p83, %p84
      %s87 = sadd.s32 %s86, 1
      %p90 = scmp.eq.s32.totalorder %s17, 1
      %p91 = scmp.ne.s32.totalorder %s86, %s88
      %p92 = scmp.eq.s32.totalorder %s17, 0
      %p93 = por %p91, %p92
      %p94 = scmp.ne.s32.totalorder %s86, %s88
      %p95 = scmp.eq.s32.totalorder %s22, 1
      %p96 = por %p94, %p95
      %p97 = scmp.ne.s32.totalorder %s88, %s89
      %p98 = scmp.eq.s32.totalorder %s22, 0
      %p99 = por %p97, %p98
      %p100 = scmp.ne.s32.totalorder %s88, %s89
      %p101 = scmp.eq.s32.totalorder %s23, 1
      %p102 = por %p100, %p101
      %p104 = scmp.ne.s32.totalorder %s89, %s103
      %p105 = scmp.eq.s32.totalorder %s23, 0
      %p106 = por %p104, %p105
      %s108 = sadd.s32 %s107, 1
      %p111 = scmp.eq.s32.totalorder %s17, 1
      %p112 = scmp.ne.s32.totalorder %s107, %s109
      %p113 = scmp.eq.s32.totalorder %s17, 0
      %p114 = por %p112, %p113
      %p115 = scmp.ne.s32.totalorder %s107, %s109
      %p116 = scmp.eq.s32.totalorder %s22, 1
      %p117 = por %p115, %p116
      %p118 = scmp.ne.s32.totalorder %s109, %s110
      %p119 = scmp.eq.s32.totalorder %s22, 0
      %p120 = por %p118, %p119
      %p121 = scmp.ne.s32.totalorder %s109, %s110
      %p122 = scmp.eq.s32.totalorder %s23, 1
      %p123 = por %p121, %p122
      %p125 = scmp.ne.s32.totalorder %s110, %s124
      %p126 = scmp.eq.s32.totalorder %s23, 0
      %p127 = por %p125, %p126
      %s129 = sadd.s32 %s128, 1
      %p132 = scmp.eq.s32.totalorder %s17, 1
      %p133 = scmp.ne.s32.totalorder %s128, %s130
      %p134 = scmp.eq.s32.totalorder %s17, 0
      %p135 = por %p133, %p134
      %p136 = scmp.ne.s32.totalorder %s128, %s130
      %p137 = scmp.eq.s32.totalorder %s22, 1
      %p138 = por %p136, %p137
      %p139 = scmp.ne.s32.totalorder %s130, %s131
      %p140 = scmp.eq.s32.totalorder %s22, 0
      %p141 = por %p139, %p140
      %p142 = scmp.ne.s32.totalorder %s130, %s131
      %p143 = scmp.eq.s32.totalorder %s23, 1
      %p144 = por %p142, %p143
      %p146 = scmp.ne.s32.totalorder %s131, %s145
      %p147 = scmp.eq.s32.totalorder %s23, 0
      %p148 = por %p146, %p147
      %s149 = ssub.s32 %s24, %s36
      %s150 = ssub.s32 %s25, %s32
      %s151 = sor.u32 %s149, %s150
      %p152 = scmp.eq.s32.totalorder %s151, 0
      %s154 = sadd.s32 %s153, 1
      %s155 = scalar_select %p152, %s153, %s154
      %p158 = pneg %p152
      %p159 = scmp.eq.s32.totalorder %s17, 1
      %p160 = por %p158, %p159
      %p161 = scmp.ne.s32.totalorder %s153, %s156
      %p162 = scmp.eq.s32.totalorder %s17, 0
      %p163 = por %p161, %p162
      %p164 = scmp.ne.s32.totalorder %s153, %s156
      %p165 = scmp.eq.s32.totalorder %s22, 1
      %p166 = por %p164, %p165
      %p167 = scmp.ne.s32.totalorder %s156, %s157
      %p168 = scmp.eq.s32.totalorder %s22, 0
      %p169 = por %p167, %p168
      %p170 = scmp.ne.s32.totalorder %s156, %s157
      %p171 = scmp.eq.s32.totalorder %s23, 1
      %p172 = por %p170, %p171
      %p174 = scmp.ne.s32.totalorder %s157, %s173
      %p175 = scmp.eq.s32.totalorder %s23, 0
      %p176 = por %p174, %p175
      %p177 = scmp.le.s32.totalorder 1, %s17
      %p178 = scmp.lt.s32.totalorder %s17, 3
      %p179 = pnand %p177, %p178
      %p180 = pneg %p179
      // Predicated region
      $region9: #{tpu_custom_call.1} parent=5 // pred_check
        _
      $region10: #{tpu_custom_call.1} parent=5 // pred_check_branch
        %182 = sbr.rel (%p179) target = $region12
      $region11: #{tpu_custom_call.1} parent=5 // pred_region
        %s183 = ssub.s32 %s17, 1
        // Predicated region
        $region13: #{tpu_custom_call.1} parent=11 // pred_check
          %p184 = pneg %p78
        $region14: #{tpu_custom_call.1} parent=11 // pred_check_branch
          %186 = sbr.rel (%p184) target = $region16
        $region15: #{tpu_custom_call.1} parent=11 // pred_region
          _
        $region16: #{tpu_custom_call.1} parent=11 // pred_fallthru
          _
        // Predicated region
        $region17: #{tpu_custom_call.1} parent=11 // pred_check
          %p187 = pneg %p99
        $region18: #{tpu_custom_call.1} parent=11 // pred_check_branch
          %189 = sbr.rel (%p187) target = $region20
        $region19: #{tpu_custom_call.1} parent=11 // pred_region
          _
        $region20: #{tpu_custom_call.1} parent=11 // pred_fallthru
          _
        // Predicated region
        $region21: #{tpu_custom_call.1} parent=11 // pred_check
          %p190 = pneg %p120
        $region22: #{tpu_custom_call.1} parent=11 // pred_check_branch
          %192 = sbr.rel (%p190) target = $region24
        $region23: #{tpu_custom_call.1} parent=11 // pred_region
          _
        $region24: #{tpu_custom_call.1} parent=11 // pred_fallthru
          _
        // Predicated region
        $region25: #{tpu_custom_call.1} parent=11 // pred_check
          %p193 = pneg %p141
        $region26: #{tpu_custom_call.1} parent=11 // pred_check_branch
          %195 = sbr.rel (%p193) target = $region28
        $region27: #{tpu_custom_call.1} parent=11 // pred_region
          _
        $region28: #{tpu_custom_call.1} parent=11 // pred_fallthru
          _
      $region12: #{tpu_custom_call.1} parent=5 // pred_fallthru
        _
      %p196 = scmp.lt.s32.totalorder %s17, 2
      // Predicated region
      $region29: #{tpu_custom_call.1} parent=5 // pred_check
        %p197 = pneg %p196
      $region30: #{tpu_custom_call.1} parent=5 // pred_check_branch
        %199 = sbr.rel (%p197) target = $region32
      $region31: #{tpu_custom_call.1} parent=5 // pred_region
        // Predicated region
        $region33: #{tpu_custom_call.1} parent=31 // pred_check
          %p200 = pneg %p51
        $region34: #{tpu_custom_call.1} parent=31 // pred_check_branch
          %202 = sbr.rel (%p200) target = $region36
        $region35: #{tpu_custom_call.1} parent=31 // pred_region
          %s203 = sand.u32 %s41, 1
          %s204 = scalar_lea.sflag [#allocation3], %s203
          %s205 = sand.u32 %s41, 1
          %s206 = smul.addr %s205, 64
          %s207 = scalar_lea.vmem [#allocation2], %s206
          %s208 = smul.u32 2, %s25
          %s210 = ssub.s32 1024, 1024
          %211 = vsyncadd %s204, %s210
          %s212 = smul.addr %s24, 8
          %s213 = sadd.s32 %s208, %s212
          %s214 = smul.addr %s213, 128
          %s215 = scalar_lea.hbm %s0, %s214
          %s216 = sshll.u32 %s207, 4
          %s217 = int_to_ptr.vmem [resolvable:$true] %s216
          %222 = dma.hbm_to_vmem [thread:$0]  %s215, 1024, %s217, %s204, 256, 256, 16
        $region36: #{tpu_custom_call.1} parent=31 // pred_fallthru
          _
      $region32: #{tpu_custom_call.1} parent=5 // pred_fallthru
        _
      %p223 = scmp.le.s32.totalorder 1, %s17
      %p224 = scmp.lt.s32.totalorder %s17, 3
      %p225 = pnand %p223, %p224
      %p226 = pneg %p225
      // Predicated region
      $region37: #{tpu_custom_call.1} parent=5 // pred_check
        _
      $region38: #{tpu_custom_call.1} parent=5 // pred_check_branch
        %228 = sbr.rel (%p225) target = $region40
      $region39: #{tpu_custom_call.1} parent=5 // pred_region
        %s229 = ssub.s32 %s17, 1
        %s230 = sand.u32 %s44, 1
        %s231 = scalar_lea.sflag [#allocation3], %s230
        %s232 = sand.u32 %s44, 1
        %s233 = smul.addr %s232, 64
        %s234 = scalar_lea.vmem [#allocation2], %s233
        // Predicated region
        $region41: #{tpu_custom_call.1} parent=39 // pred_check
          %p235 = pneg %p57
        $region42: #{tpu_custom_call.1} parent=39 // pred_check_branch
          %237 = sbr.rel (%p235) target = $region44
        $region43: #{tpu_custom_call.1} parent=39 // pred_region
          %238 = dma.done %s231, 1024
        $region44: #{tpu_custom_call.1} parent=39 // pred_fallthru
          _
        %s239 = sand.u32 %s44, 1
        %s240 = scalar_lea.sflag [#allocation3], %s239
        %s241 = sand.u32 %s44, 1
        %s242 = smul.addr %s241, 64
        %s243 = scalar_lea.vmem [#allocation2], %s242
        %p244 = pneg %p57
        %p245 = pneg %p54
        %p246 = pneg %p78
        %p247 = pneg %p75
        %p248 = pneg %p99
        %p249 = pneg %p96
        %p250 = pneg %p120
        %p251 = pneg %p117
        %p252 = pneg %p141
        %p253 = pneg %p138
        %p254 = pneg %p169
        %p255 = pneg %p166
        %s256 = sand.u32 %s156, 1
        %s257 = scalar_lea.sflag [#allocation4], %s256
        %s258 = sand.u32 %s156, 1
        %s259 = smul.addr %s258, 64
        %s260 = scalar_lea.vmem [#allocation5], %s259
        %s261 = smul.u32 2, %s27
        %s262 = smul.u32 2, %s27
        %v263 = vld [vmem:[%s234] sm:$0xff]
        %v264 = vld [vmem:[%s234 + $0x8] sm:$0xff]
        %v265 = vld [vmem:[%s234 + $0x10] sm:$0xff]
        %v266 = vld [vmem:[%s234 + $0x18] sm:$0xff]
        %v267 = vld [vmem:[%s234 + $0x20] sm:$0xff]
        %v268 = vld [vmem:[%s234 + $0x28] sm:$0xff]
        %v269 = vld [vmem:[%s234 + $0x30] sm:$0xff]
        %v270 = vld [vmem:[%s234 + $0x38] sm:$0xff]
        %v271 = vld [vmem:[%s1] sm:$0xff]
        %v272 = vld [vmem:[%s1 + $0x8] sm:$0xff]
        %v273 = vld [vmem:[%s1 + $0x10] sm:$0xff]
        %v274 = vld [vmem:[%s1 + $0x18] sm:$0xff]
        %v275 = vld [vmem:[%s2] sm:$0xff]
        %v276 = vld [vmem:[%s2 + $0x8] sm:$0xff]
        %v277 = vld [vmem:[%s2 + $0x10] sm:$0xff]
        %v278 = vld [vmem:[%s2 + $0x18] sm:$0xff]
        %280 = vset.pattern.permute.xlu0 0
        %281 = vperm.xlu0 %280, %v275
        %v282 = vpop.permute.xlu0 %281
        %285 = vset.pattern.permute.xlu0 0
        %286 = vperm.xlu0 %285, %v276
        %v287 = vpop.permute.xlu0 %286
        %290 = vset.pattern.permute.xlu0 0
        %291 = vperm.xlu0 %290, %v277
        %v292 = vpop.permute.xlu0 %291
        %295 = vset.pattern.permute.xlu0 0
        %296 = vperm.xlu0 %295, %v278
        %v297 = vpop.permute.xlu0 %296
        %vm299 = vcmask 261120
        %v301 = vsel %vm299, %v271, 0
        %v304 = vsel %vm299, %v272, 0
        %v307 = vsel %vm299, %v273, 0
        %v310 = vsel %vm299, %v274, 0
        %312 = vmatprep.subr.mxu0 0.0
        %313 = vmatpush1.msra.mxu0 0.0
        %314 = vmatprep.subr.mxu0 0.0
        %315 = vmatpush1.msra.mxu0 0.0
        %316 = vmatprep.subr.mxu0 0.0
        %317 = vmatpush1.msra.mxu0 0.0
        %318 = vmatprep.subr.mxu0 0.0
        %319 = vmatpush1.msra.mxu0 0.0
        %320 = vmatprep.subr.mxu0 0.0
        %321 = vmatpush1.msra.mxu0 0.0
        %322 = vmatprep.subr.mxu0 0.0
        %323 = vmatpush1.msra.mxu0 0.0
        %324 = vmatprep.subr.mxu0 0.0
        %325 = vmatpush1.msra.mxu0 0.0
        %326 = vmatprep.subr.mxu0 0.0
        %327 = vmatpush1.msra.mxu0 0.0
        %328 = vmatprep.subr.mxu0 0.0
        %329 = vmatpush1.msra.mxu0 0.0
        %330 = vmatprep.subr.mxu0 0.0
        %331 = vmatpush1.msra.mxu0 0.0
        %332 = vmatprep.subr.mxu0 0.0
        %333 = vmatpush1.msra.mxu0 0.0
        %334 = vmatprep.subr.mxu0 0.0
        %335 = vmatpush1.msra.mxu0 0.0
        %336 = vmatprep.subr.mxu0 %v270
        %337 = vmatpush1.msra.mxu0 %v269
        %338 = vmatprep.subr.mxu0 %v268
        %339 = vmatpush1.msra.mxu0 %v267
        %340 = vmatprep.subr.mxu0 %v266
        %341 = vmatpush1.msra.mxu0 %v265
        %342 = vmatprep.subr.mxu0 %v264
        %343 = vmatpush1.msra.mxu0 %v263
        %344 = vmatprep.subr.mxu0 0.0
        %345 = vmatpush2.msra.mxu0 0.0
        %346 = vmatprep.subr.mxu0 0.0
        %347 = vmatpush2.msra.mxu0 0.0
        %348 = vmatprep.subr.mxu0 0.0
        %349 = vmatpush2.msra.mxu0 0.0
        %350 = vmatprep.subr.mxu0 0.0
        %351 = vmatpush2.msra.mxu0 0.0
        %352 = vmatprep.subr.mxu0 0.0
        %353 = vmatpush2.msra.mxu0 0.0
        %354 = vmatprep.subr.mxu0 0.0
        %355 = vmatpush2.msra.mxu0 0.0
        %356 = vmatprep.subr.mxu0 0.0
        %357 = vmatpush2.msra.mxu0 0.0
        %358 = vmatprep.subr.mxu0 0.0
        %359 = vmatpush2.msra.mxu0 0.0
        %360 = vmatprep.subr.mxu0 0.0
        %361 = vmatpush2.msra.mxu0 0.0
        %362 = vmatprep.subr.mxu0 0.0
        %363 = vmatpush2.msra.mxu0 0.0
        %364 = vmatprep.subr.mxu0 0.0
        %365 = vmatpush2.msra.mxu0 0.0
        %366 = vmatprep.subr.mxu0 0.0
        %367 = vmatpush2.msra.mxu0 0.0
        %368 = vmatprep.subr.mxu0 0.0
        %369 = vmatpush2.msra.mxu0 0.0
        %370 = vmatprep.subr.mxu0 0.0
        %371 = vmatpush2.msra.mxu0 0.0
        %372 = vmatprep.subr.mxu0 0.0
        %373 = vmatpush2.msra.mxu0 0.0
        %374 = vmatprep.subr.mxu0 0.0
        %375 = vmatpush2.msra.mxu0 0.0
        %376 = vmatprep.mubr.f32.mxu0 0.0
        %377 = vmatmul.mubr.f32.gmra.mxu0 %v301
        %v378 = vpop.f32.mrf.mxu0
        %v379 = vadd.f32 %v282, %v378
        %v380 = vpop.f32.mrf.mxu0
        %v381 = vadd.f32 %v282, %v380
        %382 = vmatprep.mubr.f32.mxu0 0.0
        %383 = vmatmul.mubr.f32.gmra.mxu0 %v304
        %v384 = vpop.f32.mrf.mxu0
        %v385 = vadd.f32 %v287, %v384
        %v386 = vpop.f32.mrf.mxu0
        %v387 = vadd.f32 %v287, %v386
        %388 = vmatprep.mubr.f32.mxu0 0.0
        %389 = vmatmul.mubr.f32.gmra.mxu0 %v307
        %v390 = vpop.f32.mrf.mxu0
        %v391 = vadd.f32 %v292, %v390
        %v392 = vpop.f32.mrf.mxu0
        %v393 = vadd.f32 %v292, %v392
        %394 = vmatprep.mubr.f32.mxu0 0.0
        %395 = vmatmul.mubr.f32.gmra.mxu0 %v310
        %v396 = vpop.f32.mrf.mxu0
        %v397 = vadd.f32 %v297, %v396
        %v398 = vpop.f32.mrf.mxu0
        %v399 = vadd.f32 %v297, %v398
        %400 = vdwg.mxu0
        %v401 = vmax.f32 %v379, 0.0
        %v402 = vmax.f32 %v381, 0.0
        %v403 = vmax.f32 %v385, 0.0
        %v404 = vmax.f32 %v387, 0.0
        %v405 = vmax.f32 %v391, 0.0
        %v406 = vmax.f32 %v393, 0.0
        %v407 = vmax.f32 %v397, 0.0
        %v408 = vmax.f32 %v399, 0.0
        %v409 = vld [vmem:[%s3] sm:$0xff]
        %v410 = vld [vmem:[%s3 + $0x8] sm:$0xff]
        %v411 = vld [vmem:[%s3 + $0x10] sm:$0xff]
        %v412 = vld [vmem:[%s3 + $0x18] sm:$0xff]
        %v413 = vld [vmem:[%s4] sm:$0xff]
        %v414 = vld [vmem:[%s4 + $0x8] sm:$0xff]
        %v415 = vld [vmem:[%s4 + $0x10] sm:$0xff]
        %v416 = vld [vmem:[%s4 + $0x18] sm:$0xff]
        %418 = vset.pattern.permute.xlu0 0
        %419 = vperm.xlu0 %418, %v413
        %v420 = vpop.permute.xlu0 %419
        %423 = vset.pattern.permute.xlu0 0
        %424 = vperm.xlu0 %423, %v414
        %v425 = vpop.permute.xlu0 %424
        %428 = vset.pattern.permute.xlu0 0
        %429 = vperm.xlu0 %428, %v415
        %v430 = vpop.permute.xlu0 %429
        %433 = vset.pattern.permute.xlu0 0
        %434 = vperm.xlu0 %433, %v416
        %v435 = vpop.permute.xlu0 %434
        %v438 = vsel %vm299, %v409, 0
        %v441 = vsel %vm299, %v410, 0
        %v444 = vsel %vm299, %v411, 0
        %v447 = vsel %vm299, %v412, 0
        %449 = vmatprep.subr.mxu0 0.0
        %450 = vmatpush1.msra.mxu0 0.0
        %451 = vmatprep.subr.mxu0 0.0
        %452 = vmatpush1.msra.mxu0 0.0
        %453 = vmatprep.subr.mxu0 0.0
        %454 = vmatpush1.msra.mxu0 0.0
        %455 = vmatprep.subr.mxu0 0.0
        %456 = vmatpush1.msra.mxu0 0.0
        %457 = vmatprep.subr.mxu0 0.0
        %458 = vmatpush1.msra.mxu0 0.0
        %459 = vmatprep.subr.mxu0 0.0
        %460 = vmatpush1.msra.mxu0 0.0
        %461 = vmatprep.subr.mxu0 0.0
        %462 = vmatpush1.msra.mxu0 0.0
        %463 = vmatprep.subr.mxu0 0.0
        %464 = vmatpush1.msra.mxu0 0.0
        %465 = vmatprep.subr.mxu0 0.0
        %466 = vmatpush1.msra.mxu0 0.0
        %467 = vmatprep.subr.mxu0 0.0
        %468 = vmatpush1.msra.mxu0 0.0
        %469 = vmatprep.subr.mxu0 0.0
        %470 = vmatpush1.msra.mxu0 0.0
        %471 = vmatprep.subr.mxu0 0.0
        %472 = vmatpush1.msra.mxu0 0.0
        %473 = vmatprep.subr.mxu0 %v408
        %474 = vmatpush1.msra.mxu0 %v407
        %475 = vmatprep.subr.mxu0 %v406
        %476 = vmatpush1.msra.mxu0 %v405
        %477 = vmatprep.subr.mxu0 %v404
        %478 = vmatpush1.msra.mxu0 %v403
        %479 = vmatprep.subr.mxu0 %v402
        %480 = vmatpush1.msra.mxu0 %v401
        %481 = vmatprep.subr.mxu0 0.0
        %482 = vmatpush2.msra.mxu0 0.0
        %483 = vmatprep.subr.mxu0 0.0
        %484 = vmatpush2.msra.mxu0 0.0
        %485 = vmatprep.subr.mxu0 0.0
        %486 = vmatpush2.msra.mxu0 0.0
        %487 = vmatprep.subr.mxu0 0.0
        %488 = vmatpush2.msra.mxu0 0.0
        %489 = vmatprep.subr.mxu0 0.0
        %490 = vmatpush2.msra.mxu0 0.0
        %491 = vmatprep.subr.mxu0 0.0
        %492 = vmatpush2.msra.mxu0 0.0
        %493 = vmatprep.subr.mxu0 0.0
        %494 = vmatpush2.msra.mxu0 0.0
        %495 = vmatprep.subr.mxu0 0.0
        %496 = vmatpush2.msra.mxu0 0.0
        %497 = vmatprep.subr.mxu0 0.0
        %498 = vmatpush2.msra.mxu0 0.0
        %499 = vmatprep.subr.mxu0 0.0
        %500 = vmatpush2.msra.mxu0 0.0
        %501 = vmatprep.subr.mxu0 0.0
        %502 = vmatpush2.msra.mxu0 0.0
        %503 = vmatprep.subr.mxu0 0.0
        %504 = vmatpush2.msra.mxu0 0.0
        %505 = vmatprep.subr.mxu0 0.0
        %506 = vmatpush2.msra.mxu0 0.0
        %507 = vmatprep.subr.mxu0 0.0
        %508 = vmatpush2.msra.mxu0 0.0
        %509 = vmatprep.subr.mxu0 0.0
        %510 = vmatpush2.msra.mxu0 0.0
        %511 = vmatprep.subr.mxu0 0.0
        %512 = vmatpush2.msra.mxu0 0.0
        %513 = vmatprep.mubr.f32.mxu0 0.0
        %514 = vmatmul.mubr.f32.gmra.mxu0 %v438
        %v515 = vpop.f32.mrf.mxu0
        %v516 = vadd.f32 %v420, %v515
        %v517 = vpop.f32.mrf.mxu0
        %v518 = vadd.f32 %v420, %v517
        %519 = vmatprep.mubr.f32.mxu0 0.0
        %520 = vmatmul.mubr.f32.gmra.mxu0 %v441
        %v521 = vpop.f32.mrf.mxu0
        %v522 = vadd.f32 %v425, %v521
        %v523 = vpop.f32.mrf.mxu0
        %v524 = vadd.f32 %v425, %v523
        %525 = vmatprep.mubr.f32.mxu0 0.0
        %526 = vmatmul.mubr.f32.gmra.mxu0 %v444
        %v527 = vpop.f32.mrf.mxu0
        %v528 = vadd.f32 %v430, %v527
        %v529 = vpop.f32.mrf.mxu0
        %v530 = vadd.f32 %v430, %v529
        %531 = vmatprep.mubr.f32.mxu0 0.0
        %532 = vmatmul.mubr.f32.gmra.mxu0 %v447
        %v533 = vpop.f32.mrf.mxu0
        %v534 = vadd.f32 %v435, %v533
        %v535 = vpop.f32.mrf.mxu0
        %v536 = vadd.f32 %v435, %v535
        %537 = vdwg.mxu0
        %v538 = vmul.f32 %v516, %v516
        %v539 = vmul.f32 %v518, %v518
        %v540 = vmul.f32 %v522, %v522
        %v541 = vmul.f32 %v524, %v524
        %v542 = vmul.f32 %v528, %v528
        %v543 = vmul.f32 %v530, %v530
        %v544 = vmul.f32 %v534, %v534
        %v545 = vmul.f32 %v536, %v536
        %v546 = vadd.f32 %v538, %v540
        %v547 = vadd.f32 %v546, %v542
        %v548 = vadd.f32 %v547, %v544
        %v549 = vrot.slane %v548, 4
        %v550 = vadd.f32 %v548, %v549
        %v551 = vrot.slane %v550, 2
        %v552 = vadd.f32 %v550, %v551
        %v553 = vrot.slane %v552, 1
        %v554 = vadd.f32 %v552, %v553
        %v555 = vadd.f32 %v539, %v541
        %v556 = vadd.f32 %v555, %v543
        %v557 = vadd.f32 %v556, %v545
        %v558 = vrot.slane %v557, 4
        %v559 = vadd.f32 %v557, %v558
        %v560 = vrot.slane %v559, 2
        %v561 = vadd.f32 %v559, %v560
        %v562 = vrot.slane %v561, 1
        %v563 = vadd.f32 %v561, %v562
        %v564 = vmax.f32 %v554, 1e-24
        %v565 = vmax.f32 %v563, 1e-24
        %v566 = vrsqrt.pop %v564
        %v567 = vrsqrt.pop %v565
        %v568 = vmul.f32 %v516, %v566
        %v569 = vmul.f32 %v518, %v567
        %v570 = vmul.f32 %v522, %v566
        %v571 = vmul.f32 %v524, %v567
        %v572 = vmul.f32 %v528, %v566
        %v573 = vmul.f32 %v530, %v567
        %v574 = vmul.f32 %v534, %v566
        %v575 = vmul.f32 %v536, %v567
        %576 = vst [vmem:[%s260] sm:$0xff] %v568
        %577 = vst [vmem:[%s260 + $0x8] sm:$0xff] %v569
        %578 = vst [vmem:[%s260 + $0x10] sm:$0xff] %v570
        %579 = vst [vmem:[%s260 + $0x18] sm:$0xff] %v571
        %580 = vst [vmem:[%s260 + $0x20] sm:$0xff] %v572
        %581 = vst [vmem:[%s260 + $0x28] sm:$0xff] %v573
        %582 = vst [vmem:[%s260 + $0x30] sm:$0xff] %v574
        %583 = vst [vmem:[%s260 + $0x38] sm:$0xff] %v575
        %s584 = sand.u32 %s156, 1
        %s585 = scalar_lea.sflag [#allocation4], %s584
        %s586 = sand.u32 %s156, 1
        %s587 = smul.addr %s586, 64
        %s588 = scalar_lea.vmem [#allocation5], %s587
        // Predicated region
        $region45: #{tpu_custom_call.1} parent=39 // pred_check
          %p589 = pneg %p166
        $region46: #{tpu_custom_call.1} parent=39 // pred_check_branch
          %591 = sbr.rel (%p589) target = $region48
        $region47: #{tpu_custom_call.1} parent=39 // pred_region
          %s592 = smul.u32 2, %s27
          %s594 = ssub.s32 1024, 1024
          %595 = vsyncadd %s585, %s594
          %s596 = smul.addr %s26, 8
          %s597 = sadd.s32 %s592, %s596
          %s598 = smul.addr %s597, 128
          %s599 = scalar_lea.hbm %s5, %s598
          %s600 = sshll.u32 %s588, 4
          %s601 = int_to_ptr.vmem [resolvable:$true] %s600
          %606 = dma.vmem_to_hbm [thread:$0]  %s601, 1024, %s599, %s585, 256, 256, 16
        $region48: #{tpu_custom_call.1} parent=39 // pred_fallthru
          _
      $region40: #{tpu_custom_call.1} parent=5 // pred_fallthru
        _
      %p607 = scmp.le.s32.totalorder 2, %s17
      // Predicated region
      $region49: #{tpu_custom_call.1} parent=5 // pred_check
        %p608 = pneg %p607
      $region50: #{tpu_custom_call.1} parent=5 // pred_check_branch
        %610 = sbr.rel (%p608) target = $region52
      $region51: #{tpu_custom_call.1} parent=5 // pred_region
        %s611 = ssub.s32 %s17, 2
        // Predicated region
        $region53: #{tpu_custom_call.1} parent=51 // pred_check
          %p612 = pneg %p172
        $region54: #{tpu_custom_call.1} parent=51 // pred_check_branch
          %614 = sbr.rel (%p612) target = $region56
        $region55: #{tpu_custom_call.1} parent=51 // pred_region
          %s615 = sand.u32 %s157, 1
          %s616 = scalar_lea.sflag [#allocation4], %s615
          %s617 = sand.u32 %s157, 1
          %s618 = smul.addr %s617, 64
          %s619 = scalar_lea.vmem [#allocation5], %s618
          %620 = dma.done %s616, 1024
        $region56: #{tpu_custom_call.1} parent=51 // pred_fallthru
          _
      $region52: #{tpu_custom_call.1} parent=5 // pred_fallthru
        _
    $region6: #{tpu_custom_call.1} parent=1 // loop_footer
      %s21 = sadd.s32 1, %s17
    $region7: #{tpu_custom_call.1} parent=1 // loop_footer_branch
      %16 = sbr.rel target = $region3
    $region8: #{tpu_custom_call.1} parent=1 // loop_exit
      _
    %621 = vsyncpa [#allocation3], 1
    %s622 = scalar_lea.sflag [#allocation3], 1
    %623 = vsyncpa %s622, 1
    %624 = vsyncpa [#allocation4], 1
    %s625 = scalar_lea.sflag [#allocation4], 1
    %626 = vsyncpa %s625, 1

</llo_original>
